<compile_context>
chip_gen: v5e
topology: v5e:2x2
jax: 0.10.0
libtpu: 0.0.40
codegen_flags: <defaults>
</compile_context>

<pallas_src>
import jax
import jax.numpy as jnp
import numpy as np
from jax import lax
from jax.experimental import pallas as pl
from jax.experimental.pallas import tpu as pltpu

_SUB = 32  # j sub-chunk (sublanes) per fused compare/select/reduce step


def cox_nll_kernel(n_ref, rows_i_ref, cols_j_ref, out_ref, denom_sc):
    """One (i-tile, j-tile) step of the Cox partial-likelihood denominator.

    n_ref      : SMEM (1,)         int32  -- true sample count (scalar prefetch)
    rows_i_ref : VMEM (3, TILE_I)  f32    -- i-tile rows [time; pred - m; event]
    cols_j_ref : VMEM (TILE_J, 2)  f32    -- j-tile cols [time, pred - m]
    out_ref    : VMEM (1, TILE_I)  f32    -- event-masked nll, written at last j
    denom_sc   : VMEM (1, TILE_I)  f32    -- running risk-set denominator (row)
    """
    j = pl.program_id(1)
    tile_i = rows_i_ref.shape[1]
    tile_j = cols_j_ref.shape[0]
    n = n_ref[0]

    @pl.when(j == 0)
    def _init():
        denom_sc[...] = jnp.zeros_like(denom_sc)

    t_i = rows_i_ref[0:1, :]                                        # (1, Ti)
    j_base = j * tile_j

    # Fused compare + select + sublane reduce in (SUB, TILE_I) chunks so the
    # risk partials stay in vregs (no materialized (Npad, Tj) risk tile).
    acc = jnp.zeros((1, tile_i), jnp.float32)
    for lo in range(0, tile_j, _SUB):                               # static unroll
        t_c = cols_j_ref[lo:lo + _SUB, 0:1]                         # (SUB, 1)
        p_c = cols_j_ref[lo:lo + _SUB, 1:2]                         # (SUB, 1)
        idx = j_base + lo + lax.broadcasted_iota(jnp.int32, (_SUB, 1), 0)
        w_c = jnp.where(idx < n, jnp.exp(p_c), 0.0)                 # (SUB, 1)
        contrib = jnp.where(t_c >= t_i, w_c, 0.0)                   # (SUB, Ti)
        acc = acc + jnp.sum(contrib, axis=0, keepdims=True)         # (1, Ti)
    denom_sc[...] += acc

    @pl.when(j == pl.num_programs(1) - 1)
    def _finalize():
        p_i = rows_i_ref[1:2, :]                                     # (1, Ti)
        e_i = rows_i_ref[2:3, :]                                     # (1, Ti), 0 on pad
        nll = jnp.log(denom_sc[...]) - p_i
        # select (not multiply) so padded / censored rows contribute exactly 0
        out_ref[...] = jnp.where(e_i > 0.0, nll, 0.0)


def cox_neg_partial_log_likelihood(event, time, pred):
    """event: (N,) bool, time: (N,) float, pred: (N,) or (N,1) float log-hazards."""
    n = int(event.shape[0])

    time_f = time.astype(jnp.float32).reshape(-1)
    pred_f = pred.astype(jnp.float32).reshape(-1)
    event_f = event.astype(jnp.float32).reshape(-1)

    # Hoisted global exp-shift (replaces the previous in-kernel online LSE).
    m = jnp.max(pred_f)
    pred_s = pred_f - m

    # Tile sizes: per-step working set < ~0.5 MiB -> safe on v5e/v6e/v7x VMEM.
    tile = 128 if n <= 128 else 256
    npad = ((n + tile - 1) // tile) * tile
    pad = npad - n

    # Lane-major i-stream: rows [time; pred - m; event], shape (3, Npad).
    rows = jnp.pad(jnp.stack([time_f, pred_s, event_f], axis=0),
                   ((0, 0), (0, pad)))
    # Sublane-major j-stream: cols [time, pred - m], shape (Npad, 2).
    cols = jnp.pad(jnp.stack([time_f, pred_s], axis=1),
                   ((0, pad), (0, 0)))
    n_arr = jnp.array([n], jnp.int32)

    n_tiles = npad // tile
    out = pl.pallas_call(
        cox_nll_kernel,
        out_shape=jax.ShapeDtypeStruct((1, npad), jnp.float32),
        grid_spec=pltpu.PrefetchScalarGridSpec(
            num_scalar_prefetch=1,
            grid=(n_tiles, n_tiles),          # (i-tiles parallel, j-tiles reduce)
            in_specs=[
                pl.BlockSpec((3, tile), lambda i, j, n_ref: (0, i)),
                pl.BlockSpec((tile, 2), lambda i, j, n_ref: (j, 0)),
            ],
            out_specs=pl.BlockSpec((1, tile), lambda i, j, n_ref: (0, i)),
            scratch_shapes=[pltpu.VMEM((1, tile), jnp.float32)],
        ),
        compiler_params=pltpu.CompilerParams(
            dimension_semantics=("parallel", "arbitrary")),
    )(n_arr, rows, cols)

    num = jnp.sum(out)
    cnt = jnp.sum(event_f)
    # Mean over event samples; undefined (NaN) if the batch has no events.
    return jnp.where(cnt > 0, num / jnp.maximum(cnt, 1.0), jnp.float32(jnp.nan))


def custom_loss_forward(event, time, pred):
    """Equivalent of custom_loss.forward(event, time, pred)."""
    return cox_neg_partial_log_likelihood(event, time, pred)


def _reference_loss(event, time, pred):
    """Pure-JAX reference: sorted reverse logcumsumexp (torchsurv, no ties)."""
    pred = pred.reshape(-1).astype(jnp.float32)
    idx = jnp.argsort(time)
    p_s = pred[idx]
    e_s = event[idx]
    rev = p_s[::-1]
    m = jnp.max(rev)
    log_cum = jnp.log(jnp.cumsum(jnp.exp(rev - m))) + m
    log_denom = log_cum[::-1]
    pll = p_s - log_denom
    return -jnp.sum(jnp.where(e_s, pll, 0.0)) / jnp.sum(e_s.astype(jnp.float32))


if __name__ == "__main__":
    key = jax.random.PRNGKey(0)
    k1, k2, k3 = jax.random.split(key, 3)

    N = 8
    # continuous survival / censoring times -> no ties
    time = jax.random.uniform(k1, (N,), jnp.float32, minval=0.1, maxval=10.0)
    event = jax.random.bernoulli(k2, 0.7, (N,))
    event = event.at[0].set(True)            # guarantee at least one event
    pred = jax.random.normal(k3, (N, 1), jnp.float32)  # log hazards from a model

    loss = jax.block_until_ready(custom_loss_forward(event, time, pred))
    ref = jax.block_until_ready(_reference_loss(event, time, pred))
    assert np.allclose(np.asarray(loss), np.asarray(ref), rtol=1e-4, atol=1e-5), (
        f"pallas={loss} ref={ref}")

    print("KERNEL_OK")
</pallas_src>

<mosaic_0001>
module attributes {stable_mosaic.version = 11 : i64} {
  func.func @cox_nll_kernel(%arg0: i32, %arg1: i32, %arg2: memref<1xi32, #tpu.memory_space<smem>>, %arg3: memref<3x128xf32, #tpu.memory_space<vmem>>, %arg4: memref<128x2xf32, #tpu.memory_space<vmem>>, %arg5: memref<1x128xf32, #tpu.memory_space<vmem>>, %arg6: memref<1x128xf32, #tpu.memory_space<vmem>>) attributes {dimension_semantics = [#tpu.dimension_semantics<parallel>, #tpu.dimension_semantics<arbitrary>], iteration_bounds = array<i64: 1, 1>, scalar_prefetch = 1 : i64, scratch_operands = 1 : i64, tpu.core_type = #tpu.core_type<tc>, window_params = [{transform_indices = @transform_0, window_bounds = array<i64: 3, 128>}, {transform_indices = @transform_1, window_bounds = array<i64: 128, 2>}, {transform_indices = @transform_2, window_bounds = array<i64: 1, 128>}]} {
    %c0 = arith.constant 0 : index
    %0 = memref.load %arg2[%c0] : memref<1xi32, #tpu.memory_space<smem>>
    %c0_i32 = arith.constant 0 : i32
    %1 = arith.cmpi eq, %arg1, %c0_i32 : i32
    %2 = arith.extui %1 : i1 to i32
    %c0_i32_0 = arith.constant 0 : i32
    %3 = arith.cmpi ne, %2, %c0_i32_0 : i32
    scf.if %3 {
      %cst_34 = arith.constant 0.000000e+00 : f32
      %97 = vector.broadcast %cst_34 : f32 to vector<1x128xf32>
      %c0_35 = arith.constant 0 : index
      %c0_36 = arith.constant 0 : index
      %98 = vector.load %arg6[%c0_35, %c0_36] : memref<1x128xf32, #tpu.memory_space<vmem>>, vector<1x128xf32>
      tpu.vector_store %arg6[%c0_35, %c0_36], %97 {strides = array<i32>} : memref<1x128xf32, #tpu.memory_space<vmem>>, vector<1x128xf32>,
    } else {
    }
    %c0_1 = arith.constant 0 : index
    %c0_2 = arith.constant 0 : index
    %4 = vector.load %arg3[%c0_1, %c0_2] : memref<3x128xf32, #tpu.memory_space<vmem>>, vector<1x128xf32>
    %c128_i32 = arith.constant 128 : i32
    %5 = arith.muli %arg1, %c128_i32 : i32
    %cst = arith.constant 0.000000e+00 : f32
    %6 = vector.broadcast %cst : f32 to vector<1x128xf32>
    %c0_3 = arith.constant 0 : index
    %c0_4 = arith.constant 0 : index
    %7 = vector.load %arg4[%c0_3, %c0_4] : memref<128x2xf32, #tpu.memory_space<vmem>>, vector<32x1xf32>
    %c0_5 = arith.constant 0 : index
    %c1 = arith.constant 1 : index
    %8 = vector.load %arg4[%c0_5, %c1] : memref<128x2xf32, #tpu.memory_space<vmem>>, vector<32x1xf32>
    %c0_i32_6 = arith.constant 0 : i32
    %9 = arith.addi %5, %c0_i32_6 : i32
    %10 = tpu.iota {dimensions = array<i32: 0>} : vector<32x1xi32>
    %11 = vector.broadcast %9 : i32 to vector<32x1xi32>
    %12 = arith.addi %11, %10 : vector<32x1xi32>
    %13 = vector.broadcast %0 : i32 to vector<32x1xi32>
    %14 = arith.cmpi slt, %12, %13 : vector<32x1xi32>
    %15 = math.exp %8 : vector<32x1xf32>
    %cst_7 = arith.constant 0.000000e+00 : f32
    %16 = vector.broadcast %cst_7 : f32 to vector<32x1xf32>
    %17 = arith.select %14, %15, %16 : vector<32x1xi1>, vector<32x1xf32>
    %18 = vector.broadcast %7 : vector<32x1xf32> to vector<32x128xf32>
    %19 = vector.broadcast %4 : vector<1x128xf32> to vector<32x128xf32>
    %20 = arith.cmpf oge, %18, %19 : vector<32x128xf32>
    %cst_8 = arith.constant 0.000000e+00 : f32
    %21 = vector.shape_cast %17 : vector<32x1xf32> to vector<32x1xf32>
    %22 = vector.broadcast %21 : vector<32x1xf32> to vector<32x128xf32>
    %23 = vector.broadcast %cst_8 : f32 to vector<32x128xf32>
    %24 = arith.select %20, %22, %23 : vector<32x128xi1>, vector<32x128xf32>
    %cst_9 = arith.constant dense<0.000000e+00> : vector<128xf32>
    %25 = vector.multi_reduction <add>, %24, %cst_9 [0] : vector<32x128xf32> to vector<128xf32>
    %26 = vector.shape_cast %25 : vector<128xf32> to vector<1x128xf32>
    %27 = arith.addf %6, %26 : vector<1x128xf32>
    %c32 = arith.constant 32 : index
    %c0_10 = arith.constant 0 : index
    %28 = vector.load %arg4[%c32, %c0_10] : memref<128x2xf32, #tpu.memory_space<vmem>>, vector<32x1xf32>
    %c32_11 = arith.constant 32 : index
    %c1_12 = arith.constant 1 : index
    %29 = vector.load %arg4[%c32_11, %c1_12] : memref<128x2xf32, #tpu.memory_space<vmem>>, vector<32x1xf32>
    %c32_i32 = arith.constant 32 : i32
    %30 = arith.addi %5, %c32_i32 : i32
    %31 = tpu.iota {dimensions = array<i32: 0>} : vector<32x1xi32>
    %32 = vector.broadcast %30 : i32 to vector<32x1xi32>
    %33 = arith.addi %32, %31 : vector<32x1xi32>
    %34 = vector.broadcast %0 : i32 to vector<32x1xi32>
    %35 = arith.cmpi slt, %33, %34 : vector<32x1xi32>
    %36 = math.exp %29 : vector<32x1xf32>
    %cst_13 = arith.constant 0.000000e+00 : f32
    %37 = vector.broadcast %cst_13 : f32 to vector<32x1xf32>
    %38 = arith.select %35, %36, %37 : vector<32x1xi1>, vector<32x1xf32>
    %39 = vector.broadcast %28 : vector<32x1xf32> to vector<32x128xf32>
    %40 = vector.broadcast %4 : vector<1x128xf32> to vector<32x128xf32>
    %41 = arith.cmpf oge, %39, %40 : vector<32x128xf32>
    %cst_14 = arith.constant 0.000000e+00 : f32
    %42 = vector.shape_cast %38 : vector<32x1xf32> to vector<32x1xf32>
    %43 = vector.broadcast %42 : vector<32x1xf32> to vector<32x128xf32>
    %44 = vector.broadcast %cst_14 : f32 to vector<32x128xf32>
    %45 = arith.select %41, %43, %44 : vector<32x128xi1>, vector<32x128xf32>
    %cst_15 = arith.constant dense<0.000000e+00> : vector<128xf32>
    %46 = vector.multi_reduction <add>, %45, %cst_15 [0] : vector<32x128xf32> to vector<128xf32>
    %47 = vector.shape_cast %46 : vector<128xf32> to vector<1x128xf32>
    %48 = arith.addf %27, %47 : vector<1x128xf32>
    %c64 = arith.constant 64 : index
    %c0_16 = arith.constant 0 : index
    %49 = vector.load %arg4[%c64, %c0_16] : memref<128x2xf32, #tpu.memory_space<vmem>>, vector<32x1xf32>
    %c64_17 = arith.constant 64 : index
    %c1_18 = arith.constant 1 : index
    %50 = vector.load %arg4[%c64_17, %c1_18] : memref<128x2xf32, #tpu.memory_space<vmem>>, vector<32x1xf32>
    %c64_i32 = arith.constant 64 : i32
    %51 = arith.addi %5, %c64_i32 : i32
    %52 = tpu.iota {dimensions = array<i32: 0>} : vector<32x1xi32>
    %53 = vector.broadcast %51 : i32 to vector<32x1xi32>
    %54 = arith.addi %53, %52 : vector<32x1xi32>
    %55 = vector.broadcast %0 : i32 to vector<32x1xi32>
    %56 = arith.cmpi slt, %54, %55 : vector<32x1xi32>
    %57 = math.exp %50 : vector<32x1xf32>
    %cst_19 = arith.constant 0.000000e+00 : f32
    %58 = vector.broadcast %cst_19 : f32 to vector<32x1xf32>
    %59 = arith.select %56, %57, %58 : vector<32x1xi1>, vector<32x1xf32>
    %60 = vector.broadcast %49 : vector<32x1xf32> to vector<32x128xf32>
    %61 = vector.broadcast %4 : vector<1x128xf32> to vector<32x128xf32>
    %62 = arith.cmpf oge, %60, %61 : vector<32x128xf32>
    %cst_20 = arith.constant 0.000000e+00 : f32
    %63 = vector.shape_cast %59 : vector<32x1xf32> to vector<32x1xf32>
    %64 = vector.broadcast %63 : vector<32x1xf32> to vector<32x128xf32>
    %65 = vector.broadcast %cst_20 : f32 to vector<32x128xf32>
    %66 = arith.select %62, %64, %65 : vector<32x128xi1>, vector<32x128xf32>
    %cst_21 = arith.constant dense<0.000000e+00> : vector<128xf32>
    %67 = vector.multi_reduction <add>, %66, %cst_21 [0] : vector<32x128xf32> to vector<128xf32>
    %68 = vector.shape_cast %67 : vector<128xf32> to vector<1x128xf32>
    %69 = arith.addf %48, %68 : vector<1x128xf32>
    %c96 = arith.constant 96 : index
    %c0_22 = arith.constant 0 : index
    %70 = vector.load %arg4[%c96, %c0_22] : memref<128x2xf32, #tpu.memory_space<vmem>>, vector<32x1xf32>
    %c96_23 = arith.constant 96 : index
    %c1_24 = arith.constant 1 : index
    %71 = vector.load %arg4[%c96_23, %c1_24] : memref<128x2xf32, #tpu.memory_space<vmem>>, vector<32x1xf32>
    %c96_i32 = arith.constant 96 : i32
    %72 = arith.addi %5, %c96_i32 : i32
    %73 = tpu.iota {dimensions = array<i32: 0>} : vector<32x1xi32>
    %74 = vector.broadcast %72 : i32 to vector<32x1xi32>
    %75 = arith.addi %74, %73 : vector<32x1xi32>
    %76 = vector.broadcast %0 : i32 to vector<32x1xi32>
    %77 = arith.cmpi slt, %75, %76 : vector<32x1xi32>
    %78 = math.exp %71 : vector<32x1xf32>
    %cst_25 = arith.constant 0.000000e+00 : f32
    %79 = vector.broadcast %cst_25 : f32 to vector<32x1xf32>
    %80 = arith.select %77, %78, %79 : vector<32x1xi1>, vector<32x1xf32>
    %81 = vector.broadcast %70 : vector<32x1xf32> to vector<32x128xf32>
    %82 = vector.broadcast %4 : vector<1x128xf32> to vector<32x128xf32>
    %83 = arith.cmpf oge, %81, %82 : vector<32x128xf32>
    %cst_26 = arith.constant 0.000000e+00 : f32
    %84 = vector.shape_cast %80 : vector<32x1xf32> to vector<32x1xf32>
    %85 = vector.broadcast %84 : vector<32x1xf32> to vector<32x128xf32>
    %86 = vector.broadcast %cst_26 : f32 to vector<32x128xf32>
    %87 = arith.select %83, %85, %86 : vector<32x128xi1>, vector<32x128xf32>
    %cst_27 = arith.constant dense<0.000000e+00> : vector<128xf32>
    %88 = vector.multi_reduction <add>, %87, %cst_27 [0] : vector<32x128xf32> to vector<128xf32>
    %89 = vector.shape_cast %88 : vector<128xf32> to vector<1x128xf32>
    %90 = arith.addf %69, %89 : vector<1x128xf32>
    %c0_28 = arith.constant 0 : index
    %c0_29 = arith.constant 0 : index
    %91 = vector.load %arg6[%c0_28, %c0_29] : memref<1x128xf32, #tpu.memory_space<vmem>>, vector<1x128xf32>
    %92 = arith.addf %91, %90 : vector<1x128xf32>
    %c0_30 = arith.constant 0 : index
    %c0_31 = arith.constant 0 : index
    %93 = vector.load %arg6[%c0_30, %c0_31] : memref<1x128xf32, #tpu.memory_space<vmem>>, vector<1x128xf32>
    tpu.vector_store %arg6[%c0_30, %c0_31], %92 {strides = array<i32>} : memref<1x128xf32, #tpu.memory_space<vmem>>, vector<1x128xf32>,
    %c0_i32_32 = arith.constant 0 : i32
    %94 = arith.cmpi eq, %arg1, %c0_i32_32 : i32
    %95 = arith.extui %94 : i1 to i32
    %c0_i32_33 = arith.constant 0 : i32
    %96 = arith.cmpi ne, %95, %c0_i32_33 : i32
    scf.if %96 {
      %c1_34 = arith.constant 1 : index
      %c0_35 = arith.constant 0 : index
      %97 = vector.load %arg3[%c1_34, %c0_35] : memref<3x128xf32, #tpu.memory_space<vmem>>, vector<1x128xf32>
      %c2 = arith.constant 2 : index
      %c0_36 = arith.constant 0 : index
      %98 = vector.load %arg3[%c2, %c0_36] : memref<3x128xf32, #tpu.memory_space<vmem>>, vector<1x128xf32>
      %c0_37 = arith.constant 0 : index
      %c0_38 = arith.constant 0 : index
      %99 = vector.load %arg6[%c0_37, %c0_38] : memref<1x128xf32, #tpu.memory_space<vmem>>, vector<1x128xf32>
      %100 = math.log %99 : vector<1x128xf32>
      %101 = arith.subf %100, %97 : vector<1x128xf32>
      %cst_39 = arith.constant 0.000000e+00 : f32
      %102 = vector.broadcast %cst_39 : f32 to vector<1x128xf32>
      %103 = arith.cmpf ogt, %98, %102 : vector<1x128xf32>
      %cst_40 = arith.constant 0.000000e+00 : f32
      %104 = vector.broadcast %cst_40 : f32 to vector<1x128xf32>
      %105 = arith.select %103, %101, %104 : vector<1x128xi1>, vector<1x128xf32>
      %c0_41 = arith.constant 0 : index
      %c0_42 = arith.constant 0 : index
      %106 = vector.load %arg5[%c0_41, %c0_42] : memref<1x128xf32, #tpu.memory_space<vmem>>, vector<1x128xf32>
      tpu.vector_store %arg5[%c0_41, %c0_42], %105 {strides = array<i32>} : memref<1x128xf32, #tpu.memory_space<vmem>>, vector<1x128xf32>,
    } else {
    }
    return
  }
  func.func @transform_0(%arg0: i32, %arg1: i32, %arg2: memref<1xi32, #tpu.memory_space<smem>>) -> (i32, i32) {
    %c0_i32 = arith.constant 0 : i32
    %c0_i32_0 = arith.constant 0 : i32
    return %c0_i32, %arg0 : i32, i32
  }
  func.func @transform_1(%arg0: i32, %arg1: i32, %arg2: memref<1xi32, #tpu.memory_space<smem>>) -> (i32, i32) {
    %c0_i32 = arith.constant 0 : i32
    %c0_i32_0 = arith.constant 0 : i32
    return %arg1, %c0_i32 : i32, i32
  }
  func.func @transform_2(%arg0: i32, %arg1: i32, %arg2: memref<1xi32, #tpu.memory_space<smem>>) -> (i32, i32) {
    %c0_i32 = arith.constant 0 : i32
    %c0_i32_0 = arith.constant 0 : i32
    return %c0_i32, %arg0 : i32, i32
  }
}

</mosaic_0001>

<llo_original>
// kernel: tpu_custom_call.1
$region0: #{tpu_custom_call.1}
  #allocation0 [shape = 'u32[]', space=smem, size = 0x4, offset = 0x4, fixed_abs, tag = 'smem constant byte address 0x4 - core index']
  #allocation1 [shape = 'u32[72,128]{1,0:T(1,128)}', space=vmem, size = 0x9000, scoped, tag = 'internal scratch']
  #allocation2 [shape = 'f32[1,128]{1,0:T(1,128)}', space=vmem, size = 0x200, scoped, tag = 'scratch operand']
  #allocation3 [shape = 's32[1]{0}', space=sflag, size = 0x4, scoped, tag = 'scoped memory for tpu_custom_call.1']
  #allocation4 [shape = 's32[1]{0:T(128)S(6)}', space=smem, size = 0x200, scoped, tag = 'prefetched SMEM operand 0']
  %s0 = inlined_call_operand.<no memory space> [shape: s32[1], index: 0, kind: input, shape index: {}]
  %s1 = inlined_call_operand.vmem [shape: f32[3,128], index: 1, kind: input, shape index: {}]
  %s2 = inlined_call_operand.vmem [shape: f32[128,2], index: 2, kind: input, shape index: {}]
  %s3 = inlined_call_operand.hbm [shape: f32[1,128], index: 3, kind: output, shape index: {}]
  %s4 = sld [smem:[#allocation0]]
  $region26: #{tpu_custom_call.1} parent=0
    _
  %s6 = ssub.s32 1, %s4
  %s7 = scalar_select 0, %s6, %s4
  %8 = sst [smem:[#allocation4]] %s0
  $region1: #{tpu_custom_call.1} parent=0
    #allocation5 [shape = 'u8[512]{0}', space=vmem, size = 0x400, scoped, tag = 'output window, operand 0, single buffered']
    #allocation6 [shape = 's32[1]{0}', space=sflag, size = 0x4, scoped, tag = 'scoped memory for tpu_custom_call.1']
    %9 = vsyncpa [#allocation6], 0
    // Predicated region
    $region2: #{tpu_custom_call.1} parent=1 // pred_check
      _
    $region3: #{tpu_custom_call.1} parent=1 // pred_check_branch
      %11 = sbr.rel (0) target = $region5
    $region4: #{tpu_custom_call.1} parent=1 // pred_region
      _
    $region5: #{tpu_custom_call.1} parent=1 // pred_fallthru
      _
    // Predicated region
    $region6: #{tpu_custom_call.1} parent=1 // pred_check
      _
    $region7: #{tpu_custom_call.1} parent=1 // pred_check_branch
      %13 = sbr.rel (0) target = $region9
    $region8: #{tpu_custom_call.1} parent=1 // pred_region
      _
    $region9: #{tpu_custom_call.1} parent=1 // pred_fallthru
      _
    %s14 = sld [smem:[#allocation4]]
    %p15 = scmp.eq.s32.totalorder 0, 0
    // Predicated region
    $region10: #{tpu_custom_call.1} parent=1 // pred_check
      %p16 = pneg %p15
    $region11: #{tpu_custom_call.1} parent=1 // pred_check_branch
      %18 = sbr.rel (%p16) target = $region13
    $region12: #{tpu_custom_call.1} parent=1 // pred_region
      %19 = vst [vmem:[#allocation2] sm:$0x1] 0.0
    $region13: #{tpu_custom_call.1} parent=1 // pred_fallthru
      _
    %v20 = vld [vmem:[%s1] sm:$0x1]
    %s21 = smul.u32 0, 128
    %v22 = vld [vmem:[%s2] sm:$0xff]
    %v23 = vld [vmem:[%s2 + $0x8] sm:$0xff]
    %v24 = vld [vmem:[%s2 + $0x10] sm:$0xff]
    %v25 = vld [vmem:[%s2 + $0x18] sm:$0xff]
    %v26 = vlaneseq
    %v27 = vshrl.u32 %v26, 7
    %v28 = vadd.s32 %v27, 8
    %v29 = vadd.s32 %v27, 16
    %v30 = vadd.s32 %v27, 24
    %v31 = vstv %s21
    %v32 = vadd.s32 %v31, %v27
    %v33 = vadd.s32 %v31, %v28
    %v34 = vadd.s32 %v31, %v29
    %v35 = vadd.s32 %v31, %v30
    %v36 = vstv %s14
    %vm37 = vcmp.lt.s32.totalorder %v32, %v36
    %vm38 = vcmp.lt.s32.totalorder %v33, %v36
    %vm39 = vcmp.lt.s32.totalorder %v34, %v36
    %vm40 = vcmp.lt.s32.totalorder %v35, %v36
    %v41 = vmul.f32 %v22, 1.442695
    %v42 = vpow.pop %v41
    %v43 = vmul.f32 %v23, 1.442695
    %v44 = vpow.pop %v43
    %v45 = vmul.f32 %v24, 1.442695
    %v46 = vpow.pop %v45
    %v47 = vmul.f32 %v25, 1.442695
    %v48 = vpow.pop %v47
    %v49 = vsel %vm37, %v42, 0.0
    %v50 = vsel %vm38, %v44, 0.0
    %v51 = vsel %vm39, %v46, 0.0
    %v52 = vsel %vm40, %v48, 0.0
    %54 = vset.pattern.permute.xlu0 0
    %55 = vperm.xlu0 %54, %v22
    %v56 = vpop.permute.xlu0 %55
    %59 = vset.pattern.permute.xlu0 0
    %60 = vperm.xlu0 %59, %v23
    %v61 = vpop.permute.xlu0 %60
    %64 = vset.pattern.permute.xlu0 0
    %65 = vperm.xlu0 %64, %v24
    %v66 = vpop.permute.xlu0 %65
    %69 = vset.pattern.permute.xlu0 0
    %70 = vperm.xlu0 %69, %v25
    %v71 = vpop.permute.xlu0 %70
    %v73 = vperm.slane %v20, 0
    %vm74 = vcmp.ge.f32.partialorder %v56, %v73
    %vm75 = vcmp.ge.f32.partialorder %v61, %v73
    %vm76 = vcmp.ge.f32.partialorder %v66, %v73
    %vm77 = vcmp.ge.f32.partialorder %v71, %v73
    %79 = vset.pattern.permute.xlu0 1
    %80 = vperm.xlu0 %79, %v49
    %v81 = vpop.permute.xlu0 %80
    %84 = vset.pattern.permute.xlu0 1
    %85 = vperm.xlu0 %84, %v50
    %v86 = vpop.permute.xlu0 %85
    %89 = vset.pattern.permute.xlu0 1
    %90 = vperm.xlu0 %89, %v51
    %v91 = vpop.permute.xlu0 %90
    %94 = vset.pattern.permute.xlu0 1
    %95 = vperm.xlu0 %94, %v52
    %v96 = vpop.permute.xlu0 %95
    %v98 = vsel %vm74, %v81, 0.0
    %v99 = vsel %vm75, %v86, 0.0
    %v100 = vsel %vm76, %v91, 0.0
    %v101 = vsel %vm77, %v96, 0.0
    %v102 = vadd.f32 %v98, %v99
    %v103 = vadd.f32 %v102, %v100
    %v104 = vadd.f32 %v103, %v101
    %v105 = vrot.slane %v104, 4
    %v106 = vadd.f32 %v104, %v105
    %v107 = vrot.slane %v106, 2
    %v108 = vadd.f32 %v106, %v107
    %v109 = vrot.slane %v108, 1
    %v110 = vadd.f32 %v108, %v109
    %v111 = vadd.f32 %v110, 0.0
    %v112 = vld [vmem:[%s2 + $0x20] sm:$0xff]
    %v113 = vld [vmem:[%s2 + $0x28] sm:$0xff]
    %v114 = vld [vmem:[%s2 + $0x30] sm:$0xff]
    %v115 = vld [vmem:[%s2 + $0x38] sm:$0xff]
    %s116 = sadd.s32 %s21, 32
    %v117 = vstv %s116
    %v118 = vadd.s32 %v117, %v27
    %v119 = vadd.s32 %v117, %v28
    %v120 = vadd.s32 %v117, %v29
    %v121 = vadd.s32 %v117, %v30
    %vm122 = vcmp.lt.s32.totalorder %v118, %v36
    %vm123 = vcmp.lt.s32.totalorder %v119, %v36
    %vm124 = vcmp.lt.s32.totalorder %v120, %v36
    %vm125 = vcmp.lt.s32.totalorder %v121, %v36
    %v126 = vmul.f32 %v112, 1.442695
    %v127 = vpow.pop %v126
    %v128 = vmul.f32 %v113, 1.442695
    %v129 = vpow.pop %v128
    %v130 = vmul.f32 %v114, 1.442695
    %v131 = vpow.pop %v130
    %v132 = vmul.f32 %v115, 1.442695
    %v133 = vpow.pop %v132
    %v134 = vsel %vm122, %v127, 0.0
    %v135 = vsel %vm123, %v129, 0.0
    %v136 = vsel %vm124, %v131, 0.0
    %v137 = vsel %vm125, %v133, 0.0
    %139 = vset.pattern.permute.xlu0 0
    %140 = vperm.xlu0 %139, %v112
    %v141 = vpop.permute.xlu0 %140
    %144 = vset.pattern.permute.xlu0 0
    %145 = vperm.xlu0 %144, %v113
    %v146 = vpop.permute.xlu0 %145
    %149 = vset.pattern.permute.xlu0 0
    %150 = vperm.xlu0 %149, %v114
    %v151 = vpop.permute.xlu0 %150
    %154 = vset.pattern.permute.xlu0 0
    %155 = vperm.xlu0 %154, %v115
    %v156 = vpop.permute.xlu0 %155
    %vm158 = vcmp.ge.f32.partialorder %v141, %v73
    %vm159 = vcmp.ge.f32.partialorder %v146, %v73
    %vm160 = vcmp.ge.f32.partialorder %v151, %v73
    %vm161 = vcmp.ge.f32.partialorder %v156, %v73
    %163 = vset.pattern.permute.xlu0 1
    %164 = vperm.xlu0 %163, %v134
    %v165 = vpop.permute.xlu0 %164
    %168 = vset.pattern.permute.xlu0 1
    %169 = vperm.xlu0 %168, %v135
    %v170 = vpop.permute.xlu0 %169
    %173 = vset.pattern.permute.xlu0 1
    %174 = vperm.xlu0 %173, %v136
    %v175 = vpop.permute.xlu0 %174
    %178 = vset.pattern.permute.xlu0 1
    %179 = vperm.xlu0 %178, %v137
    %v180 = vpop.permute.xlu0 %179
    %v182 = vsel %vm158, %v165, 0.0
    %v183 = vsel %vm159, %v170, 0.0
    %v184 = vsel %vm160, %v175, 0.0
    %v185 = vsel %vm161, %v180, 0.0
    %v186 = vadd.f32 %v182, %v183
    %v187 = vadd.f32 %v186, %v184
    %v188 = vadd.f32 %v187, %v185
    %v189 = vrot.slane %v188, 4
    %v190 = vadd.f32 %v188, %v189
    %v191 = vrot.slane %v190, 2
    %v192 = vadd.f32 %v190, %v191
    %v193 = vrot.slane %v192, 1
    %v194 = vadd.f32 %v192, %v193
    %v195 = vadd.f32 %v111, %v194
    %v196 = vld [vmem:[%s2 + $0x40] sm:$0xff]
    %v197 = vld [vmem:[%s2 + $0x48] sm:$0xff]
    %v198 = vld [vmem:[%s2 + $0x50] sm:$0xff]
    %v199 = vld [vmem:[%s2 + $0x58] sm:$0xff]
    %s200 = sadd.s32 %s21, 64
    %v201 = vstv %s200
    %v202 = vadd.s32 %v201, %v27
    %v203 = vadd.s32 %v201, %v28
    %v204 = vadd.s32 %v201, %v29
    %v205 = vadd.s32 %v201, %v30
    %vm206 = vcmp.lt.s32.totalorder %v202, %v36
    %vm207 = vcmp.lt.s32.totalorder %v203, %v36
    %vm208 = vcmp.lt.s32.totalorder %v204, %v36
    %vm209 = vcmp.lt.s32.totalorder %v205, %v36
    %v210 = vmul.f32 %v196, 1.442695
    %v211 = vpow.pop %v210
    %v212 = vmul.f32 %v197, 1.442695
    %v213 = vpow.pop %v212
    %v214 = vmul.f32 %v198, 1.442695
    %v215 = vpow.pop %v214
    %v216 = vmul.f32 %v199, 1.442695
    %v217 = vpow.pop %v216
    %v218 = vsel %vm206, %v211, 0.0
    %v219 = vsel %vm207, %v213, 0.0
    %v220 = vsel %vm208, %v215, 0.0
    %v221 = vsel %vm209, %v217, 0.0
    %223 = vset.pattern.permute.xlu0 0
    %224 = vperm.xlu0 %223, %v196
    %v225 = vpop.permute.xlu0 %224
    %228 = vset.pattern.permute.xlu0 0
    %229 = vperm.xlu0 %228, %v197
    %v230 = vpop.permute.xlu0 %229
    %233 = vset.pattern.permute.xlu0 0
    %234 = vperm.xlu0 %233, %v198
    %v235 = vpop.permute.xlu0 %234
    %238 = vset.pattern.permute.xlu0 0
    %239 = vperm.xlu0 %238, %v199
    %v240 = vpop.permute.xlu0 %239
    %vm242 = vcmp.ge.f32.partialorder %v225, %v73
    %vm243 = vcmp.ge.f32.partialorder %v230, %v73
    %vm244 = vcmp.ge.f32.partialorder %v235, %v73
    %vm245 = vcmp.ge.f32.partialorder %v240, %v73
    %247 = vset.pattern.permute.xlu0 1
    %248 = vperm.xlu0 %247, %v218
    %v249 = vpop.permute.xlu0 %248
    %252 = vset.pattern.permute.xlu0 1
    %253 = vperm.xlu0 %252, %v219
    %v254 = vpop.permute.xlu0 %253
    %257 = vset.pattern.permute.xlu0 1
    %258 = vperm.xlu0 %257, %v220
    %v259 = vpop.permute.xlu0 %258
    %262 = vset.pattern.permute.xlu0 1
    %263 = vperm.xlu0 %262, %v221
    %v264 = vpop.permute.xlu0 %263
    %v266 = vsel %vm242, %v249, 0.0
    %v267 = vsel %vm243, %v254, 0.0
    %v268 = vsel %vm244, %v259, 0.0
    %v269 = vsel %vm245, %v264, 0.0
    %v270 = vadd.f32 %v266, %v267
    %v271 = vadd.f32 %v270, %v268
    %v272 = vadd.f32 %v271, %v269
    %v273 = vrot.slane %v272, 4
    %v274 = vadd.f32 %v272, %v273
    %v275 = vrot.slane %v274, 2
    %v276 = vadd.f32 %v274, %v275
    %v277 = vrot.slane %v276, 1
    %v278 = vadd.f32 %v276, %v277
    %v279 = vadd.f32 %v195, %v278
    %v280 = vld [vmem:[%s2 + $0x60] sm:$0xff]
    %v281 = vld [vmem:[%s2 + $0x68] sm:$0xff]
    %v282 = vld [vmem:[%s2 + $0x70] sm:$0xff]
    %v283 = vld [vmem:[%s2 + $0x78] sm:$0xff]
    %s284 = sadd.s32 %s21, 96
    %v285 = vstv %s284
    %v286 = vadd.s32 %v285, %v27
    %v287 = vadd.s32 %v285, %v28
    %v288 = vadd.s32 %v285, %v29
    %v289 = vadd.s32 %v285, %v30
    %vm290 = vcmp.lt.s32.totalorder %v286, %v36
    %vm291 = vcmp.lt.s32.totalorder %v287, %v36
    %vm292 = vcmp.lt.s32.totalorder %v288, %v36
    %vm293 = vcmp.lt.s32.totalorder %v289, %v36
    %v294 = vmul.f32 %v280, 1.442695
    %v295 = vpow.pop %v294
    %v296 = vmul.f32 %v281, 1.442695
    %v297 = vpow.pop %v296
    %v298 = vmul.f32 %v282, 1.442695
    %v299 = vpow.pop %v298
    %v300 = vmul.f32 %v283, 1.442695
    %v301 = vpow.pop %v300
    %v302 = vsel %vm290, %v295, 0.0
    %v303 = vsel %vm291, %v297, 0.0
    %v304 = vsel %vm292, %v299, 0.0
    %v305 = vsel %vm293, %v301, 0.0
    %307 = vset.pattern.permute.xlu0 0
    %308 = vperm.xlu0 %307, %v280
    %v309 = vpop.permute.xlu0 %308
    %312 = vset.pattern.permute.xlu0 0
    %313 = vperm.xlu0 %312, %v281
    %v314 = vpop.permute.xlu0 %313
    %317 = vset.pattern.permute.xlu0 0
    %318 = vperm.xlu0 %317, %v282
    %v319 = vpop.permute.xlu0 %318
    %322 = vset.pattern.permute.xlu0 0
    %323 = vperm.xlu0 %322, %v283
    %v324 = vpop.permute.xlu0 %323
    %vm326 = vcmp.ge.f32.partialorder %v309, %v73
    %vm327 = vcmp.ge.f32.partialorder %v314, %v73
    %vm328 = vcmp.ge.f32.partialorder %v319, %v73
    %vm329 = vcmp.ge.f32.partialorder %v324, %v73
    %331 = vset.pattern.permute.xlu0 1
    %332 = vperm.xlu0 %331, %v302
    %v333 = vpop.permute.xlu0 %332
    %336 = vset.pattern.permute.xlu0 1
    %337 = vperm.xlu0 %336, %v303
    %v338 = vpop.permute.xlu0 %337
    %341 = vset.pattern.permute.xlu0 1
    %342 = vperm.xlu0 %341, %v304
    %v343 = vpop.permute.xlu0 %342
    %346 = vset.pattern.permute.xlu0 1
    %347 = vperm.xlu0 %346, %v305
    %v348 = vpop.permute.xlu0 %347
    %v350 = vsel %vm326, %v333, 0.0
    %v351 = vsel %vm327, %v338, 0.0
    %v352 = vsel %vm328, %v343, 0.0
    %v353 = vsel %vm329, %v348, 0.0
    %v354 = vadd.f32 %v350, %v351
    %v355 = vadd.f32 %v354, %v352
    %v356 = vadd.f32 %v355, %v353
    %v357 = vrot.slane %v356, 4
    %v358 = vadd.f32 %v356, %v357
    %v359 = vrot.slane %v358, 2
    %v360 = vadd.f32 %v358, %v359
    %v361 = vrot.slane %v360, 1
    %v362 = vadd.f32 %v360, %v361
    %v363 = vadd.f32 %v279, %v362
    %v364 = vld [vmem:[#allocation2] sm:$0x1]
    %v365 = vadd.f32 %v364, %v363
    %366 = vst [vmem:[#allocation2] sm:$0x1] %v365
    // Predicated region
    $region14: #{tpu_custom_call.1} parent=1 // pred_check
      %p367 = pneg %p15
    $region15: #{tpu_custom_call.1} parent=1 // pred_check_branch
      %369 = sbr.rel (%p367) target = $region17
    $region16: #{tpu_custom_call.1} parent=1 // pred_region
      %v370 = vld [vmem:[%s1 + $0x1] sm:$0x1]
      %v371 = vld [vmem:[%s1 + $0x2] sm:$0x1]
      %v372 = vld [vmem:[#allocation2] sm:$0x1]
      %v373 = vlog2.pop %v372
      %v374 = vmul.f32 %v373, 0.6931472
      %v375 = vsub.f32 %v374, %v370
      %vm376 = vcmp.gt.f32.partialorder %v371, 0.0
      %v377 = vsel %vm376, %v375, 0.0
      %378 = vst [vmem:[#allocation5] sm:$0x1] %v377
    $region17: #{tpu_custom_call.1} parent=1 // pred_fallthru
      _
    // Predicated region
    $region18: #{tpu_custom_call.1} parent=1 // pred_check
      _
    $region19: #{tpu_custom_call.1} parent=1 // pred_check_branch
      %380 = sbr.rel (0) target = $region21
    $region20: #{tpu_custom_call.1} parent=1 // pred_region
      %382 = vsyncadd [#allocation6], 0
      %s384 = sshll.u32 [#allocation5], 4
      %s385 = int_to_ptr.vmem [resolvable:$true] %s384
      %s386 = sshll.u32 %s3, 4
      %s387 = int_to_ptr.hbm [resolvable:$true] %s386
      %389 = dma.vmem_to_hbm [thread:$0]  %s385, 16, %s387, [#allocation6]
    $region21: #{tpu_custom_call.1} parent=1 // pred_fallthru
      _
    // Predicated region
    $region22: #{tpu_custom_call.1} parent=1 // pred_check
      _
    $region23: #{tpu_custom_call.1} parent=1 // pred_check_branch
      %391 = sbr.rel (0) target = $region25
    $region24: #{tpu_custom_call.1} parent=1 // pred_region
      %393 = dma.done [#allocation6], 16
    $region25: #{tpu_custom_call.1} parent=1 // pred_fallthru
      _
    %394 = vsyncpa [#allocation6], 1

</llo_original>
